<compile_context>
chip_gen: v7x
topology: tpu7x:2x2x1
jax: 0.10.0
libtpu: 0.0.40
codegen_flags: <defaults>
</compile_context>

<pallas_src>
import jax
import jax.numpy as jnp
from jax import lax
from jax.experimental import pallas as pl
from jax.experimental.pallas import tpu as pltpu


def _round_up(x, m):
    return (x + m - 1) // m * m


# --------------------------------------------------------------------------
# One-time setup kernel: fuse the Linear layer with the class-vector matmul.
# --------------------------------------------------------------------------
def _fuse_kernel(w_ref, cv_ref, b_ref, wf_ref, bf_ref):
    # w_ref:  [Vp, block_f]  PyTorch Linear.weight tile (vector_dim, feature_dim)
    # cv_ref: [Cp, Vp]       class vectors (classes, vector_dim)
    # b_ref:  [1, Vp]        Linear bias
    # wf_ref: [block_f, Cp]  fused weight  = W^T @ CV^T   (tile over F)
    # bf_ref: [1, Cp]        fused bias    = b @ CV^T     (resident across F grid)
    w = w_ref[...]
    cv = cv_ref[...]
    # Contract over the shared vector_dim axis directly -- no materialized
    # transposes; the MXU consumes either operand orientation.
    wf = lax.dot_general(
        w, cv, dimension_numbers=(((0,), (1,)), ((), ())),
        preferred_element_type=jnp.float32)                       # [block_f, Cp]
    wf_ref[...] = wf.astype(wf_ref.dtype)

    @pl.when(pl.program_id(0) == 0)
    def _():
        bf = lax.dot_general(
            b_ref[...], cv, dimension_numbers=(((1,), (1,)), ((), ())),
            preferred_element_type=jnp.float32)                   # [1, Cp]
        bf_ref[...] = bf.astype(bf_ref.dtype)


# --------------------------------------------------------------------------
# Forward kernel: single dense MXU pass per B-tile.
# --------------------------------------------------------------------------
def _forward_kernel(x_ref, wf_ref, bf_ref, out_ref):
    # x_ref:  [bb, Fp]   image-feature tile
    # wf_ref: [Fp, Cp]   fused weight (resident across the B grid)
    # bf_ref: [1, Cp]    fused bias, f32 (resident)
    # out_ref:[bb, Cp]   lane-dense output tile
    acc = jnp.dot(x_ref[...], wf_ref[...], preferred_element_type=jnp.float32)
    out_ref[...] = (acc + bf_ref[...]).astype(out_ref.dtype)


# --------------------------------------------------------------------------
# Wrappers
# --------------------------------------------------------------------------
def fuse_zsl_params(class_vectors, weight, bias, *, mxu_dtype=None):
    """One-time fusion of (Linear weight/bias, classVectors) into
    (W_fused [Fp, Cp], b_fused [1, Cp]) with lane-dense (128-multiple) padding.
    Cache / jit this once; reuse its outputs for every forward.
    """
    C, V = class_vectors.shape
    Vw, F = weight.shape
    assert Vw == V and bias.shape == (V,)

    cdtype = mxu_dtype if mxu_dtype is not None else weight.dtype
    Fp = _round_up(F, 128)
    Vp = _round_up(V, 128)
    Cp = _round_up(C, 128)

    def pad2(a, shape):
        if a.shape == shape:
            return a
        return jnp.pad(a, [(0, shape[0] - a.shape[0]), (0, shape[1] - a.shape[1])])

    w_p = pad2(weight, (Vp, Fp)).astype(cdtype)
    cv_p = pad2(class_vectors, (Cp, Vp)).astype(cdtype)
    b_p = pad2(bias.reshape(1, V), (1, Vp)).astype(cdtype)

    # Tile F so the setup kernel also scales to large feature dims.
    block_f = next(t for t in (512, 256, 128) if Fp % t == 0)

    wf, bf = pl.pallas_call(
        _fuse_kernel,
        out_shape=(jax.ShapeDtypeStruct((Fp, Cp), cdtype),
                   jax.ShapeDtypeStruct((1, Cp), jnp.float32)),
        grid=(Fp // block_f,),
        in_specs=[
            pl.BlockSpec((Vp, block_f), lambda i: (0, i)),
            pl.BlockSpec((Cp, Vp), lambda i: (0, 0)),
            pl.BlockSpec((1, Vp), lambda i: (0, 0)),
        ],
        out_specs=(
            pl.BlockSpec((block_f, Cp), lambda i: (i, 0)),
            pl.BlockSpec((1, Cp), lambda i: (0, 0)),   # resident across F grid
        ),
        compiler_params=pltpu.CompilerParams(
            dimension_semantics=("arbitrary",)),
    )(w_p, cv_p, b_p)
    return wf, bf


def zsl_forward_fused(image_features, w_fused, b_fused, num_classes,
                      *, block_b=256, out_dtype=jnp.float32):
    """out[B, C] = image_features @ W_fused + b_fused (padding sliced off)."""
    B, F = image_features.shape
    Fp, Cp = w_fused.shape

    bb = min(block_b, _round_up(B, 8))
    Bp = _round_up(B, bb)

    x_p = image_features
    if (B, F) != (Bp, Fp):
        x_p = jnp.pad(image_features, [(0, Bp - B), (0, Fp - F)])
    x_p = x_p.astype(w_fused.dtype)

    out_p = pl.pallas_call(
        _forward_kernel,
        out_shape=jax.ShapeDtypeStruct((Bp, Cp), out_dtype),
        grid=(Bp // bb,),
        in_specs=[
            pl.BlockSpec((bb, Fp), lambda i: (i, 0)),
            pl.BlockSpec((Fp, Cp), lambda i: (0, 0)),   # resident weight
            pl.BlockSpec((1, Cp), lambda i: (0, 0)),    # resident fused bias
        ],
        out_specs=pl.BlockSpec((bb, Cp), lambda i: (i, 0)),
        compiler_params=pltpu.CompilerParams(
            # B-tiles are independent -> shard across TensorCores (v7x megacore).
            dimension_semantics=("parallel",)),
    )(x_p, w_fused, b_fused)

    return out_p[:B, :num_classes]


def zsl_network_forward(image_features, class_vectors, weight, bias,
                        *, mxu_dtype=None, block_b=256):
    """Convenience wrapper matching Network.forward(imageFeatures, classVectors).

    image_features: [B, F]
    class_vectors:  [C, V]
    weight:         [V, F]  (PyTorch Linear.weight layout)
    bias:           [V]
    returns:        [B, C]
    """
    C = class_vectors.shape[0]
    w_fused, b_fused = fuse_zsl_params(class_vectors, weight, bias,
                                       mxu_dtype=mxu_dtype)
    return zsl_forward_fused(image_features, w_fused, b_fused, C,
                             block_b=block_b)


if __name__ == "__main__":
    # Small, module-consistent shapes.
    B = 8            # batch of image features
    F = 32           # feature_dim
    V = 16           # vector_dim (class-embedding size)
    C = 8            # number of classes

    key = jax.random.PRNGKey(0)
    k_x, k_cv, k_w, k_b = jax.random.split(key, 4)

    image_features = jax.random.normal(k_x, (B, F), dtype=jnp.float32)
    class_vectors = jax.random.normal(k_cv, (C, V), dtype=jnp.float32)

    # Deterministic Linear init mimicking torch.nn.Linear (uniform +/- 1/sqrt(F)).
    bound = 1.0 / jnp.sqrt(jnp.float32(F))
    weight = jax.random.uniform(k_w, (V, F), minval=-bound, maxval=bound,
                                dtype=jnp.float32)
    bias = jax.random.uniform(k_b, (V,), minval=-bound, maxval=bound,
                              dtype=jnp.float32)

    # Reference (same math as the PyTorch forward).
    ref = (image_features @ weight.T + bias) @ class_vectors.T

    # f32 path.
    out = zsl_network_forward(image_features, class_vectors, weight, bias)
    out = jax.block_until_ready(out)
    assert out.shape == (B, C)
    assert jnp.allclose(out, ref, atol=1e-4, rtol=1e-4)

    # bf16 MXU-operand path (v6e/v7x recommendation); f32 accumulation keeps
    # the result close to the f32 reference.
    out_bf16 = zsl_network_forward(image_features, class_vectors, weight, bias,
                                   mxu_dtype=jnp.bfloat16)
    out_bf16 = jax.block_until_ready(out_bf16)
    assert out_bf16.shape == (B, C)
    assert jnp.allclose(out_bf16, ref, atol=2e-1, rtol=1e-1)

    print("KERNEL_OK")
</pallas_src>

<mosaic_0001>
module attributes {stable_mosaic.version = 11 : i64} {
  func.func @_fuse_kernel(%arg0: i32, %arg1: memref<128x128xf32, #tpu.memory_space<vmem>>, %arg2: memref<128x128xf32, #tpu.memory_space<vmem>>, %arg3: memref<1x128xf32, #tpu.memory_space<vmem>>, %arg4: memref<128x128xf32, #tpu.memory_space<vmem>>, %arg5: memref<1x128xf32, #tpu.memory_space<vmem>>) attributes {dimension_semantics = [#tpu.dimension_semantics<arbitrary>], iteration_bounds = array<i64: 1>, scalar_prefetch = 0 : i64, scratch_operands = 0 : i64, tpu.core_type = #tpu.core_type<tc>, window_params = [{transform_indices = @transform_0, window_bounds = array<i64: 128, 128>}, {pipeline_mode = #tpu.pipeline_mode<synchronous>, transform_indices = @transform_1, window_bounds = array<i64: 128, 128>}, {pipeline_mode = #tpu.pipeline_mode<synchronous>, transform_indices = @transform_2, window_bounds = array<i64: 1, 128>}, {transform_indices = @transform_3, window_bounds = array<i64: 128, 128>}, {pipeline_mode = #tpu.pipeline_mode<synchronous>, transform_indices = @transform_4, window_bounds = array<i64: 1, 128>}]} {
    %c0 = arith.constant 0 : index
    %c0_0 = arith.constant 0 : index
    %0 = vector.load %arg1[%c0, %c0_0] : memref<128x128xf32, #tpu.memory_space<vmem>>, vector<128x128xf32>
    %c0_1 = arith.constant 0 : index
    %c0_2 = arith.constant 0 : index
    %1 = vector.load %arg2[%c0_1, %c0_2] : memref<128x128xf32, #tpu.memory_space<vmem>>, vector<128x128xf32>
    %cst = arith.constant dense<0.000000e+00> : vector<128x128xf32>
    %2 = tpu.matmul %0, %1, %cst {dimension_numbers = #tpu.dot_dimension_numbers<[0], [1], [1], [0], [0, 1, 1, 0], [], []>} : vector<128x128xf32>, vector<128x128xf32>, vector<128x128xf32> -> vector<128x128xf32>
    %c0_3 = arith.constant 0 : index
    %c0_4 = arith.constant 0 : index
    %3 = vector.load %arg4[%c0_3, %c0_4] : memref<128x128xf32, #tpu.memory_space<vmem>>, vector<128x128xf32>
    tpu.vector_store %arg4[%c0_3, %c0_4], %2 {strides = array<i32>} : memref<128x128xf32, #tpu.memory_space<vmem>>, vector<128x128xf32>,
    %c0_i32 = arith.constant 0 : i32
    %4 = arith.cmpi eq, %arg0, %c0_i32 : i32
    %5 = arith.extui %4 : i1 to i32
    %c0_i32_5 = arith.constant 0 : i32
    %6 = arith.cmpi ne, %5, %c0_i32_5 : i32
    scf.if %6 {
      %c0_6 = arith.constant 0 : index
      %c0_7 = arith.constant 0 : index
      %7 = vector.load %arg3[%c0_6, %c0_7] : memref<1x128xf32, #tpu.memory_space<vmem>>, vector<1x128xf32>
      %cst_8 = arith.constant dense<0.000000e+00> : vector<1x128xf32>
      %8 = tpu.matmul %7, %1, %cst_8 {dimension_numbers = #tpu.dot_dimension_numbers<[1], [1], [0], [0], [0, 0, 1, 0], [], []>} : vector<1x128xf32>, vector<128x128xf32>, vector<1x128xf32> -> vector<1x128xf32>
      %c0_9 = arith.constant 0 : index
      %c0_10 = arith.constant 0 : index
      %9 = vector.load %arg5[%c0_9, %c0_10] : memref<1x128xf32, #tpu.memory_space<vmem>>, vector<1x128xf32>
      tpu.vector_store %arg5[%c0_9, %c0_10], %8 {strides = array<i32>} : memref<1x128xf32, #tpu.memory_space<vmem>>, vector<1x128xf32>,
    } else {
    }
    return
  }
  func.func @transform_0(%arg0: i32) -> (i32, i32) {
    %c0_i32 = arith.constant 0 : i32
    %c0_i32_0 = arith.constant 0 : i32
    return %c0_i32, %arg0 : i32, i32
  }
  func.func @transform_1(%arg0: i32) -> (i32, i32) {
    %c0_i32 = arith.constant 0 : i32
    %c0_i32_0 = arith.constant 0 : i32
    %c0_i32_1 = arith.constant 0 : i32
    return %c0_i32, %c0_i32_0 : i32, i32
  }
  func.func @transform_2(%arg0: i32) -> (i32, i32) {
    %c0_i32 = arith.constant 0 : i32
    %c0_i32_0 = arith.constant 0 : i32
    %c0_i32_1 = arith.constant 0 : i32
    return %c0_i32, %c0_i32_0 : i32, i32
  }
  func.func @transform_3(%arg0: i32) -> (i32, i32) {
    %c0_i32 = arith.constant 0 : i32
    %c0_i32_0 = arith.constant 0 : i32
    return %arg0, %c0_i32 : i32, i32
  }
  func.func @transform_4(%arg0: i32) -> (i32, i32) {
    %c0_i32 = arith.constant 0 : i32
    %c0_i32_0 = arith.constant 0 : i32
    %c0_i32_1 = arith.constant 0 : i32
    return %c0_i32, %c0_i32_0 : i32, i32
  }
}

</mosaic_0001>

<llo_original>
// kernel: tpu_custom_call.1
$region0: #{tpu_custom_call.1}
  #allocation0 [shape = 'u32[]', space=smem, size = 0x4, offset = 0x4, fixed_abs, tag = 'smem constant byte address 0x4 - core index']
  #allocation1 [shape = 'u32[144,128]{1,0:T(1,128)}', space=vmem, size = 0x12000, scoped, tag = 'internal scratch']
  %s0 = inlined_call_operand.hbm [shape: f32[128,128], index: 0, kind: input, shape index: {}]
  %s1 = inlined_call_operand.hbm [shape: f32[128,128], index: 1, kind: input, shape index: {}]
  %s2 = inlined_call_operand.vmem [shape: f32[1,128], index: 2, kind: input, shape index: {}]
  %s3 = inlined_call_operand.hbm [shape: f32[128,128], index: 3, kind: output, shape index: {0}]
  %s4 = inlined_call_operand.hbm [shape: f32[1,128], index: 4, kind: output, shape index: {1}]
  %5 = xla_tuple %s3, %s4
  %s6 = sld [smem:[#allocation0]]
  $region42: #{tpu_custom_call.1} parent=0
    _
  %s8 = ssub.s32 1, %s6
  %s9 = scalar_select 0, %s8, %s6
  $region1: #{tpu_custom_call.1} parent=0
    #allocation2 [shape = 'u8[65536]{0}', space=vmem, size = 0x10000, scoped, tag = 'input window, operand 0, single buffered']
    #allocation3 [shape = 's32[1]{0}', space=sflag, size = 0x4, scoped, tag = 'scoped memory for tpu_custom_call.1']
    #allocation4 [shape = 's32[1]{0}', space=sflag, size = 0x4, scoped, tag = 'scoped memory for tpu_custom_call.1']
    #allocation5 [shape = 'u8[65536]{0}', space=vmem, size = 0x10000, scoped, tag = 'input window, operand 1, single buffered']
    #allocation6 [shape = 's32[1]{0}', space=sflag, size = 0x4, scoped, tag = 'scoped memory for tpu_custom_call.1']
    #allocation7 [shape = 'u8[65536]{0}', space=vmem, size = 0x10000, scoped, tag = 'output window, operand 0, single buffered']
    #allocation8 [shape = 'u8[512]{0}', space=vmem, size = 0x400, scoped, tag = 'output window, operand 1, single buffered']
    #allocation9 [shape = 's32[1]{0}', space=sflag, size = 0x4, scoped, tag = 'scoped memory for tpu_custom_call.1']
    %10 = vsyncpa [#allocation3], 0
    %11 = vsyncpa [#allocation6], 0
    %12 = vsyncpa [#allocation4], 0
    %13 = vsyncpa [#allocation9], 0
    // Predicated region
    $region2: #{tpu_custom_call.1} parent=1 // pred_check
      _
    $region3: #{tpu_custom_call.1} parent=1 // pred_check_branch
      %15 = sbr.rel (0) target = $region5
    $region4: #{tpu_custom_call.1} parent=1 // pred_region
      %s17 = ssub.s32 2048, 2048
      %18 = vsyncadd [#allocation3], %s17
      %s19 = sshll.u32 [#allocation2], 4
      %s20 = int_to_ptr.vmem [resolvable:$true] %s19
      %25 = dma.hbm_to_vmem [thread:$0]  %s0, 2048, %s20, [#allocation3], 128, 128, 8
    $region5: #{tpu_custom_call.1} parent=1 // pred_fallthru
      _
    // Predicated region
    $region6: #{tpu_custom_call.1} parent=1 // pred_check
      _
    $region7: #{tpu_custom_call.1} parent=1 // pred_check_branch
      %27 = sbr.rel (0) target = $region9
    $region8: #{tpu_custom_call.1} parent=1 // pred_region
      %s29 = ssub.s32 2048, 2048
      %30 = vsyncadd [#allocation6], %s29
      %s31 = sshll.u32 [#allocation5], 4
      %s32 = int_to_ptr.vmem [resolvable:$true] %s31
      %37 = dma.hbm_to_vmem [thread:$0]  %s1, 2048, %s32, [#allocation6], 128, 128, 8
    $region9: #{tpu_custom_call.1} parent=1 // pred_fallthru
      _
    // Predicated region
    $region10: #{tpu_custom_call.1} parent=1 // pred_check
      _
    $region11: #{tpu_custom_call.1} parent=1 // pred_check_branch
      %39 = sbr.rel (0) target = $region13
    $region12: #{tpu_custom_call.1} parent=1 // pred_region
      _
    $region13: #{tpu_custom_call.1} parent=1 // pred_fallthru
      _
    // Predicated region
    $region14: #{tpu_custom_call.1} parent=1 // pred_check
      _
    $region15: #{tpu_custom_call.1} parent=1 // pred_check_branch
      %41 = sbr.rel (0) target = $region17
    $region16: #{tpu_custom_call.1} parent=1 // pred_region
      %42 = dma.done [#allocation3], 2048
    $region17: #{tpu_custom_call.1} parent=1 // pred_fallthru
      _
    // Predicated region
    $region18: #{tpu_custom_call.1} parent=1 // pred_check
      _
    $region19: #{tpu_custom_call.1} parent=1 // pred_check_branch
      %44 = sbr.rel (0) target = $region21
    $region20: #{tpu_custom_call.1} parent=1 // pred_region
      %45 = dma.done [#allocation6], 2048
    $region21: #{tpu_custom_call.1} parent=1 // pred_fallthru
      _
    %v46 = vld [vmem:[#allocation2] sm:$0xff]
    %v47 = vld [vmem:[#allocation2 + $0x8] sm:$0xff]
    %v48 = vld [vmem:[#allocation2 + $0x10] sm:$0xff]
    %v49 = vld [vmem:[#allocation2 + $0x18] sm:$0xff]
    %v50 = vld [vmem:[#allocation2 + $0x20] sm:$0xff]
    %v51 = vld [vmem:[#allocation2 + $0x28] sm:$0xff]
    %v52 = vld [vmem:[#allocation2 + $0x30] sm:$0xff]
    %v53 = vld [vmem:[#allocation2 + $0x38] sm:$0xff]
    %v54 = vld [vmem:[#allocation2 + $0x40] sm:$0xff]
    %v55 = vld [vmem:[#allocation2 + $0x48] sm:$0xff]
    %v56 = vld [vmem:[#allocation2 + $0x50] sm:$0xff]
    %v57 = vld [vmem:[#allocation2 + $0x58] sm:$0xff]
    %v58 = vld [vmem:[#allocation2 + $0x60] sm:$0xff]
    %v59 = vld [vmem:[#allocation2 + $0x68] sm:$0xff]
    %v60 = vld [vmem:[#allocation2 + $0x70] sm:$0xff]
    %v61 = vld [vmem:[#allocation2 + $0x78] sm:$0xff]
    %v62 = vld [vmem:[#allocation5] sm:$0xff]
    %v63 = vld [vmem:[#allocation5 + $0x8] sm:$0xff]
    %v64 = vld [vmem:[#allocation5 + $0x10] sm:$0xff]
    %v65 = vld [vmem:[#allocation5 + $0x18] sm:$0xff]
    %v66 = vld [vmem:[#allocation5 + $0x20] sm:$0xff]
    %v67 = vld [vmem:[#allocation5 + $0x28] sm:$0xff]
    %v68 = vld [vmem:[#allocation5 + $0x30] sm:$0xff]
    %v69 = vld [vmem:[#allocation5 + $0x38] sm:$0xff]
    %v70 = vld [vmem:[#allocation5 + $0x40] sm:$0xff]
    %v71 = vld [vmem:[#allocation5 + $0x48] sm:$0xff]
    %v72 = vld [vmem:[#allocation5 + $0x50] sm:$0xff]
    %v73 = vld [vmem:[#allocation5 + $0x58] sm:$0xff]
    %v74 = vld [vmem:[#allocation5 + $0x60] sm:$0xff]
    %v75 = vld [vmem:[#allocation5 + $0x68] sm:$0xff]
    %v76 = vld [vmem:[#allocation5 + $0x70] sm:$0xff]
    %v77 = vld [vmem:[#allocation5 + $0x78] sm:$0xff]
    %78 = vxpose.xlu0.b32.start [1/16] %v46, 128
    %79 = vxpose.xlu0.b32.cont [2/16] %v47, 128
    %80 = vxpose.xlu0.b32.cont [3/16] %v48, 128
    %81 = vxpose.xlu0.b32.cont [4/16] %v49, 128
    %82 = vxpose.xlu0.b32.cont [5/16] %v50, 128
    %83 = vxpose.xlu0.b32.cont [6/16] %v51, 128
    %84 = vxpose.xlu0.b32.cont [7/16] %v52, 128
    %85 = vxpose.xlu0.b32.cont [8/16] %v53, 128
    %86 = vxpose.xlu0.b32.cont [9/16] %v54, 128
    %87 = vxpose.xlu0.b32.cont [10/16] %v55, 128
    %88 = vxpose.xlu0.b32.cont [11/16] %v56, 128
    %89 = vxpose.xlu0.b32.cont [12/16] %v57, 128
    %90 = vxpose.xlu0.b32.cont [13/16] %v58, 128
    %91 = vxpose.xlu0.b32.cont [14/16] %v59, 128
    %92 = vxpose.xlu0.b32.cont [15/16] %v60, 128
    %93 = vxpose.xlu0.b32.end [16/16] %v61, 128
    %v94 = vpop.trf.xlu0
    %v95 = vpop.trf.xlu0
    %v96 = vpop.trf.xlu0
    %v97 = vpop.trf.xlu0
    %v98 = vpop.trf.xlu0
    %v99 = vpop.trf.xlu0
    %v100 = vpop.trf.xlu0
    %v101 = vpop.trf.xlu0
    %v102 = vpop.trf.xlu0
    %v103 = vpop.trf.xlu0
    %v104 = vpop.trf.xlu0
    %v105 = vpop.trf.xlu0
    %v106 = vpop.trf.xlu0
    %v107 = vpop.trf.xlu0
    %v108 = vpop.trf.xlu0
    %v109 = vpop.trf.xlu0
    %110 = vmatprep.subr.mxu0 0.0
    %111 = vmatpush1.xpose.msra.mxu0 %v62
    %112 = vmatprep.subr.mxu0 0.0
    %113 = vmatpush1.xpose.msra.mxu0 %v63
    %114 = vmatprep.subr.mxu0 0.0
    %115 = vmatpush1.xpose.msra.mxu0 %v64
    %116 = vmatprep.subr.mxu0 0.0
    %117 = vmatpush1.xpose.msra.mxu0 %v65
    %118 = vmatprep.subr.mxu0 0.0
    %119 = vmatpush1.xpose.msra.mxu0 %v66
    %120 = vmatprep.subr.mxu0 0.0
    %121 = vmatpush1.xpose.msra.mxu0 %v67
    %122 = vmatprep.subr.mxu0 0.0
    %123 = vmatpush1.xpose.msra.mxu0 %v68
    %124 = vmatprep.subr.mxu0 0.0
    %125 = vmatpush1.xpose.msra.mxu0 %v69
    %126 = vmatprep.subr.mxu0 0.0
    %127 = vmatpush1.xpose.msra.mxu0 %v70
    %128 = vmatprep.subr.mxu0 0.0
    %129 = vmatpush1.xpose.msra.mxu0 %v71
    %130 = vmatprep.subr.mxu0 0.0
    %131 = vmatpush1.xpose.msra.mxu0 %v72
    %132 = vmatprep.subr.mxu0 0.0
    %133 = vmatpush1.xpose.msra.mxu0 %v73
    %134 = vmatprep.subr.mxu0 0.0
    %135 = vmatpush1.xpose.msra.mxu0 %v74
    %136 = vmatprep.subr.mxu0 0.0
    %137 = vmatpush1.xpose.msra.mxu0 %v75
    %138 = vmatprep.subr.mxu0 0.0
    %139 = vmatpush1.xpose.msra.mxu0 %v76
    %140 = vmatprep.subr.mxu0 0.0
    %141 = vmatpush1.xpose.msra.mxu0 %v77
    %142 = vmatprep.subr.mxu0 0.0
    %143 = vmatpush1.xpose.msra.mxu0 0.0
    %144 = vmatprep.subr.mxu0 0.0
    %145 = vmatpush1.xpose.msra.mxu0 0.0
    %146 = vmatprep.subr.mxu0 0.0
    %147 = vmatpush1.xpose.msra.mxu0 0.0
    %148 = vmatprep.subr.mxu0 0.0
    %149 = vmatpush1.xpose.msra.mxu0 0.0
    %150 = vmatprep.subr.mxu0 0.0
    %151 = vmatpush1.xpose.msra.mxu0 0.0
    %152 = vmatprep.subr.mxu0 0.0
    %153 = vmatpush1.xpose.msra.mxu0 0.0
    %154 = vmatprep.subr.mxu0 0.0
    %155 = vmatpush1.xpose.msra.mxu0 0.0
    %156 = vmatprep.subr.mxu0 0.0
    %157 = vmatpush1.xpose.msra.mxu0 0.0
    %158 = vmatprep.subr.mxu0 0.0
    %159 = vmatpush1.xpose.msra.mxu0 0.0
    %160 = vmatprep.subr.mxu0 0.0
    %161 = vmatpush1.xpose.msra.mxu0 0.0
    %162 = vmatprep.subr.mxu0 0.0
    %163 = vmatpush1.xpose.msra.mxu0 0.0
    %164 = vmatprep.subr.mxu0 0.0
    %165 = vmatpush1.xpose.msra.mxu0 0.0
    %166 = vmatprep.subr.mxu0 0.0
    %167 = vmatpush1.xpose.msra.mxu0 0.0
    %168 = vmatprep.subr.mxu0 0.0
    %169 = vmatpush1.xpose.msra.mxu0 0.0
    %170 = vmatprep.subr.mxu0 0.0
    %171 = vmatpush1.xpose.msra.mxu0 0.0
    %172 = vmatprep.subr.mxu0 0.0
    %173 = vmatpush1.xpose.msra.mxu0 0.0
    %174 = vmatprep.mubr.f32.mxu0 0.0
    %175 = vmatmul.mubr.f32.gmra.mrb[0].mxu0 %v94
    %v176 = vpop.f32.mrb[0].mxu0
    %v177 = vadd.f32 0.0, %v176
    %v178 = vpop.f32.mrb[0].mxu0
    %179 = vmatprep.mubr.f32.mxu0 0.0
    %180 = vmatmul.mubr.f32.gmra.mrb[0].mxu0 %v95
    %v181 = vpop.f32.mrb[0].mxu0
    %v182 = vadd.f32 0.0, %v181
    %v183 = vpop.f32.mrb[0].mxu0
    %184 = vmatprep.mubr.f32.mxu0 0.0
    %185 = vmatmul.mubr.f32.gmra.mrb[0].mxu0 %v96
    %v186 = vpop.f32.mrb[0].mxu0
    %v187 = vadd.f32 0.0, %v186
    %v188 = vpop.f32.mrb[0].mxu0
    %189 = vmatprep.mubr.f32.mxu0 0.0
    %190 = vmatmul.mubr.f32.gmra.mrb[0].mxu0 %v97
    %v191 = vpop.f32.mrb[0].mxu0
    %v192 = vadd.f32 0.0, %v191
    %v193 = vpop.f32.mrb[0].mxu0
    %194 = vmatprep.mubr.f32.mxu0 0.0
    %195 = vmatmul.mubr.f32.gmra.mrb[0].mxu0 %v98
    %v196 = vpop.f32.mrb[0].mxu0
    %v197 = vadd.f32 0.0, %v196
    %v198 = vpop.f32.mrb[0].mxu0
    %199 = vmatprep.mubr.f32.mxu0 0.0
    %200 = vmatmul.mubr.f32.gmra.mrb[0].mxu0 %v99
    %v201 = vpop.f32.mrb[0].mxu0
    %v202 = vadd.f32 0.0, %v201
    %v203 = vpop.f32.mrb[0].mxu0
    %204 = vmatprep.mubr.f32.mxu0 0.0
    %205 = vmatmul.mubr.f32.gmra.mrb[0].mxu0 %v100
    %v206 = vpop.f32.mrb[0].mxu0
    %v207 = vadd.f32 0.0, %v206
    %v208 = vpop.f32.mrb[0].mxu0
    %209 = vmatprep.mubr.f32.mxu0 0.0
    %210 = vmatmul.mubr.f32.gmra.mrb[0].mxu0 %v101
    %v211 = vpop.f32.mrb[0].mxu0
    %v212 = vadd.f32 0.0, %v211
    %v213 = vpop.f32.mrb[0].mxu0
    %214 = vmatprep.mubr.f32.mxu0 0.0
    %215 = vmatmul.mubr.f32.gmra.mrb[0].mxu0 %v102
    %v216 = vpop.f32.mrb[0].mxu0
    %v217 = vadd.f32 0.0, %v216
    %v218 = vpop.f32.mrb[0].mxu0
    %219 = vmatprep.mubr.f32.mxu0 0.0
    %220 = vmatmul.mubr.f32.gmra.mrb[0].mxu0 %v103
    %v221 = vpop.f32.mrb[0].mxu0
    %v222 = vadd.f32 0.0, %v221
    %v223 = vpop.f32.mrb[0].mxu0
    %224 = vmatprep.mubr.f32.mxu0 0.0
    %225 = vmatmul.mubr.f32.gmra.mrb[0].mxu0 %v104
    %v226 = vpop.f32.mrb[0].mxu0
    %v227 = vadd.f32 0.0, %v226
    %v228 = vpop.f32.mrb[0].mxu0
    %229 = vmatprep.mubr.f32.mxu0 0.0
    %230 = vmatmul.mubr.f32.gmra.mrb[0].mxu0 %v105
    %v231 = vpop.f32.mrb[0].mxu0
    %v232 = vadd.f32 0.0, %v231
    %v233 = vpop.f32.mrb[0].mxu0
    %234 = vmatprep.mubr.f32.mxu0 0.0
    %235 = vmatmul.mubr.f32.gmra.mrb[0].mxu0 %v106
    %v236 = vpop.f32.mrb[0].mxu0
    %v237 = vadd.f32 0.0, %v236
    %v238 = vpop.f32.mrb[0].mxu0
    %239 = vmatprep.mubr.f32.mxu0 0.0
    %240 = vmatmul.mubr.f32.gmra.mrb[0].mxu0 %v107
    %v241 = vpop.f32.mrb[0].mxu0
    %v242 = vadd.f32 0.0, %v241
    %v243 = vpop.f32.mrb[0].mxu0
    %244 = vmatprep.mubr.f32.mxu0 0.0
    %245 = vmatmul.mubr.f32.gmra.mrb[0].mxu0 %v108
    %v246 = vpop.f32.mrb[0].mxu0
    %v247 = vadd.f32 0.0, %v246
    %v248 = vpop.f32.mrb[0].mxu0
    %249 = vmatprep.mubr.f32.mxu0 0.0
    %250 = vmatmul.mubr.f32.gmra.mrb[0].mxu0 %v109
    %v251 = vpop.f32.mrb[0].mxu0
    %v252 = vadd.f32 0.0, %v251
    %v253 = vpop.f32.mrb[0].mxu0
    %254 = vdwg.mxu0
    %255 = vst [vmem:[#allocation7] sm:$0xff] %v177
    %256 = vst [vmem:[#allocation7 + $0x8] sm:$0xff] %v182
    %257 = vst [vmem:[#allocation7 + $0x10] sm:$0xff] %v187
    %258 = vst [vmem:[#allocation7 + $0x18] sm:$0xff] %v192
    %259 = vst [vmem:[#allocation7 + $0x20] sm:$0xff] %v197
    %260 = vst [vmem:[#allocation7 + $0x28] sm:$0xff] %v202
    %261 = vst [vmem:[#allocation7 + $0x30] sm:$0xff] %v207
    %262 = vst [vmem:[#allocation7 + $0x38] sm:$0xff] %v212
    %263 = vst [vmem:[#allocation7 + $0x40] sm:$0xff] %v217
    %264 = vst [vmem:[#allocation7 + $0x48] sm:$0xff] %v222
    %265 = vst [vmem:[#allocation7 + $0x50] sm:$0xff] %v227
    %266 = vst [vmem:[#allocation7 + $0x58] sm:$0xff] %v232
    %267 = vst [vmem:[#allocation7 + $0x60] sm:$0xff] %v237
    %268 = vst [vmem:[#allocation7 + $0x68] sm:$0xff] %v242
    %269 = vst [vmem:[#allocation7 + $0x70] sm:$0xff] %v247
    %270 = vst [vmem:[#allocation7 + $0x78] sm:$0xff] %v252
    %p271 = scmp.eq.s32.totalorder 0, 0
    // Predicated region
    $region22: #{tpu_custom_call.1} parent=1 // pred_check
      %p272 = pneg %p271
    $region23: #{tpu_custom_call.1} parent=1 // pred_check_branch
      %274 = sbr.rel (%p272) target = $region25
    $region24: #{tpu_custom_call.1} parent=1 // pred_region
      %v275 = vld [vmem:[%s2] sm:$0x1]
      %276 = vmatprep.subr.mxu0 0.0
      %277 = vmatpush1.xpose.msra.mxu0 %v62
      %278 = vmatprep.subr.mxu0 0.0
      %279 = vmatpush1.xpose.msra.mxu0 %v63
      %280 = vmatprep.subr.mxu0 0.0
      %281 = vmatpush1.xpose.msra.mxu0 %v64
      %282 = vmatprep.subr.mxu0 0.0
      %283 = vmatpush1.xpose.msra.mxu0 %v65
      %284 = vmatprep.subr.mxu0 0.0
      %285 = vmatpush1.xpose.msra.mxu0 %v66
      %286 = vmatprep.subr.mxu0 0.0
      %287 = vmatpush1.xpose.msra.mxu0 %v67
      %288 = vmatprep.subr.mxu0 0.0
      %289 = vmatpush1.xpose.msra.mxu0 %v68
      %290 = vmatprep.subr.mxu0 0.0
      %291 = vmatpush1.xpose.msra.mxu0 %v69
      %292 = vmatprep.subr.mxu0 0.0
      %293 = vmatpush1.xpose.msra.mxu0 %v70
      %294 = vmatprep.subr.mxu0 0.0
      %295 = vmatpush1.xpose.msra.mxu0 %v71
      %296 = vmatprep.subr.mxu0 0.0
      %297 = vmatpush1.xpose.msra.mxu0 %v72
      %298 = vmatprep.subr.mxu0 0.0
      %299 = vmatpush1.xpose.msra.mxu0 %v73
      %300 = vmatprep.subr.mxu0 0.0
      %301 = vmatpush1.xpose.msra.mxu0 %v74
      %302 = vmatprep.subr.mxu0 0.0
      %303 = vmatpush1.xpose.msra.mxu0 %v75
      %304 = vmatprep.subr.mxu0 0.0
      %305 = vmatpush1.xpose.msra.mxu0 %v76
      %306 = vmatprep.subr.mxu0 0.0
      %307 = vmatpush1.xpose.msra.mxu0 %v77
      %308 = vmatprep.subr.mxu0 0.0
      %309 = vmatpush1.xpose.msra.mxu0 0.0
      %310 = vmatprep.subr.mxu0 0.0
      %311 = vmatpush1.xpose.msra.mxu0 0.0
      %312 = vmatprep.subr.mxu0 0.0
      %313 = vmatpush1.xpose.msra.mxu0 0.0
      %314 = vmatprep.subr.mxu0 0.0
      %315 = vmatpush1.xpose.msra.mxu0 0.0
      %316 = vmatprep.subr.mxu0 0.0
      %317 = vmatpush1.xpose.msra.mxu0 0.0
      %318 = vmatprep.subr.mxu0 0.0
      %319 = vmatpush1.xpose.msra.mxu0 0.0
      %320 = vmatprep.subr.mxu0 0.0
      %321 = vmatpush1.xpose.msra.mxu0 0.0
      %322 = vmatprep.subr.mxu0 0.0
      %323 = vmatpush1.xpose.msra.mxu0 0.0
      %324 = vmatprep.subr.mxu0 0.0
      %325 = vmatpush1.xpose.msra.mxu0 0.0
      %326 = vmatprep.subr.mxu0 0.0
      %327 = vmatpush1.xpose.msra.mxu0 0.0
      %328 = vmatprep.subr.mxu0 0.0
      %329 = vmatpush1.xpose.msra.mxu0 0.0
      %330 = vmatprep.subr.mxu0 0.0
      %331 = vmatpush1.xpose.msra.mxu0 0.0
      %332 = vmatprep.subr.mxu0 0.0
      %333 = vmatpush1.xpose.msra.mxu0 0.0
      %334 = vmatprep.subr.mxu0 0.0
      %335 = vmatpush1.xpose.msra.mxu0 0.0
      %336 = vmatprep.subr.mxu0 0.0
      %337 = vmatpush1.xpose.msra.mxu0 0.0
      %338 = vmatprep.subr.mxu0 0.0
      %339 = vmatpush1.xpose.msra.mxu0 0.0
      %340 = vmatprep.mubr.f32.mxu0 0.0
      %341 = vmatmul.mubr.f32.gmra.mrb[0].mxu0 %v275
      %v342 = vpop.f32.mrb[0].mxu0
      %v343 = vadd.f32 0.0, %v342
      %v344 = vpop.f32.mrb[0].mxu0
      %345 = vdwg.mxu0
      %346 = vst [vmem:[#allocation8] sm:$0x1] %v343
    $region25: #{tpu_custom_call.1} parent=1 // pred_fallthru
      _
    // Predicated region
    $region26: #{tpu_custom_call.1} parent=1 // pred_check
      _
    $region27: #{tpu_custom_call.1} parent=1 // pred_check_branch
      %348 = sbr.rel (0) target = $region29
    $region28: #{tpu_custom_call.1} parent=1 // pred_region
      %s350 = ssub.s32 2048, 2048
      %351 = vsyncadd [#allocation4], %s350
      %s352 = sshll.u32 [#allocation7], 4
      %s353 = int_to_ptr.vmem [resolvable:$true] %s352
      %358 = dma.vmem_to_hbm [thread:$0]  %s353, 2048, %s3, [#allocation4], 128, 128, 8
    $region29: #{tpu_custom_call.1} parent=1 // pred_fallthru
      _
    // Predicated region
    $region30: #{tpu_custom_call.1} parent=1 // pred_check
      _
    $region31: #{tpu_custom_call.1} parent=1 // pred_check_branch
      %360 = sbr.rel (0) target = $region33
    $region32: #{tpu_custom_call.1} parent=1 // pred_region
      %s362 = ssub.s32 16, 16
      %363 = vsyncadd [#allocation9], %s362
      %s365 = sshll.u32 [#allocation8], 4
      %s366 = int_to_ptr.vmem [resolvable:$true] %s365
      %368 = dma.vmem_to_hbm [thread:$0]  %s366, 16, %s4, [#allocation9]
    $region33: #{tpu_custom_call.1} parent=1 // pred_fallthru
      _
    // Predicated region
    $region34: #{tpu_custom_call.1} parent=1 // pred_check
      _
    $region35: #{tpu_custom_call.1} parent=1 // pred_check_branch
      %370 = sbr.rel (0) target = $region37
    $region36: #{tpu_custom_call.1} parent=1 // pred_region
      %371 = dma.done [#allocation4], 2048
    $region37: #{tpu_custom_call.1} parent=1 // pred_fallthru
      _
    // Predicated region
    $region38: #{tpu_custom_call.1} parent=1 // pred_check
      _
    $region39: #{tpu_custom_call.1} parent=1 // pred_check_branch
      %373 = sbr.rel (0) target = $region41
    $region40: #{tpu_custom_call.1} parent=1 // pred_region
      %374 = dma.done [#allocation9], 16
    $region41: #{tpu_custom_call.1} parent=1 // pred_fallthru
      _
    %375 = vsyncpa [#allocation3], 1
    %376 = vsyncpa [#allocation6], 1
    %377 = vsyncpa [#allocation4], 1
    %378 = vsyncpa [#allocation9], 1

</llo_original>
